<compile_context>
chip_gen: v7x
topology: tpu7x:2x2x1
jax: 0.10.0
libtpu: 0.0.40
codegen_flags: <defaults>
</compile_context>

<pallas_src>
import jax
import jax.numpy as jnp
from jax.experimental import pallas as pl
from jax.experimental.pallas import tpu as pltpu


def _final_layer_kernel(x_ref, w_ref, bias_ref, o_ref):
    # x_ref:    (1, tT, H)      token tile
    # w_ref:    (1, H, O_pad)   per-batch weight  (1 + scale_b) * W_lin (padded)
    # bias_ref: (1, 1, O_pad)   per-batch fused bias  shift_b @ W_lin + b_lin
    # o_ref:    (1, tT, O_pad)
    xf = x_ref[0].astype(jnp.float32)                       # (tT, H)
    inv_h = 1.0 / xf.shape[-1]

    # Single-pass LayerNorm statistics (f32 accumulation, eps = 1e-6).
    s = jnp.sum(xf, axis=-1, keepdims=True)                 # (tT, 1)
    s2 = jnp.sum(xf * xf, axis=-1, keepdims=True)           # (tT, 1)
    mean = s * inv_h
    var = jnp.maximum(s2 * inv_h - mean * mean, 0.0)
    rstd = jax.lax.rsqrt(var + 1e-6)                        # (tT, 1)

    # Center and cast to the MXU operand dtype; rstd is applied to the much
    # smaller (tT, O_pad) output instead of the (tT, H) input.
    xc = (xf - mean).astype(w_ref.dtype)                    # (tT, H)
    prec = (jax.lax.Precision.HIGHEST
            if w_ref.dtype == jnp.float32 else None)        # keep bf16 native
    out = jnp.dot(xc, w_ref[0], preferred_element_type=jnp.float32,
                  precision=prec)                           # (tT, O_pad)
    out = out * rstd + bias_ref[0].astype(jnp.float32)

    o_ref[0] = out.astype(o_ref.dtype)


def _device_defaults():
    """(max_tile, vmem_limit_bytes) tuned per TPU generation."""
    try:
        kind = jax.devices()[0].device_kind.lower()
    except Exception:
        kind = ""
    if "v5" in kind or "v6" in kind:
        # 128 MiB physical VMEM: bigger tiles amortize the ~0.35 us/step cost.
        return 1024, 96 * 1024 * 1024
    # v7x (64 MiB physical VMEM) and unknown chips: conservative.
    return 512, 48 * 1024 * 1024


def _choose_token_tile(T, B, max_tile):
    """Token tile: a multiple of 16 (<= max_tile) or T itself; partial tail
    blocks are handled by the cdiv grid with edge clipping. Shrink if the grid
    would be too coarse to keep the pipeline / both v7x TensorCores busy."""
    tT = min(T, max_tile)
    if tT != T:
        tT = (tT // 16) * 16
    while tT % 16 == 0 and tT >= 256 and B * ((T + tT - 1) // tT) < 8:
        tT //= 2
    return max(tT, 1)


def final_layer_pallas(x, c, w_ada, b_ada, w_lin, b_lin, *,
                       max_tile=None, vmem_limit_bytes=None,
                       return_padded=False):
    """FinalLayer forward.

    x: (B, T, H), c: (B, H), w_ada: (H, 2H), b_ada: (2H,),
    w_lin: (H, O), b_lin: (O,)  ->  (B, T, O)
    With return_padded=True the zero-padded (B, T, O_pad) tensor is returned
    so a fused consumer (e.g. unpatchify) can skip the slice pass.
    """
    B, T, H = x.shape
    O = w_lin.shape[1]

    dflt_tile, dflt_vmem = _device_defaults()
    max_tile = dflt_tile if max_tile is None else max_tile
    vmem_limit_bytes = dflt_vmem if vmem_limit_bytes is None else vmem_limit_bytes

    # ---- Hoisted adaLN branch: SiLU(c) @ W_ada + b_ada (tiny M=B matmul, f32).
    cf = c.astype(jnp.float32)
    mod = (cf * jax.nn.sigmoid(cf)) @ w_ada.astype(jnp.float32) \
        + b_ada.astype(jnp.float32)
    shift, scale = mod[:, :H], mod[:, H:]                   # (B, H) each

    # ---- Fold modulation into the projection (exact algebra):
    #   ((x - mean) * rstd * (1 + scale) + shift) @ W + b
    # = ((x - mean) @ ((1 + scale) * W)) * rstd + (shift @ W + b)
    # Note: costs B copies of the (H, O_pad) weight in HBM; cheap for typical
    # DiT batch sizes — pass scale separately instead if B is extremely large.
    w32 = w_lin.astype(jnp.float32)                         # (H, O)
    w_b = (1.0 + scale)[:, :, None] * w32[None]             # (B, H, O) f32
    bias_b = shift @ w32 + b_lin.astype(jnp.float32)        # (B, O)  f32

    # ---- Lane-dense output: pad O up to a multiple of 128 (unmasked stores).
    O_pad = ((O + 127) // 128) * 128
    if O_pad != O:
        w_b = jnp.pad(w_b, ((0, 0), (0, 0), (0, O_pad - O)))
        bias_b = jnp.pad(bias_b, ((0, 0), (0, O_pad - O)))
    w_b = w_b.astype(w_lin.dtype)
    bias_b = bias_b.reshape(B, 1, O_pad)                    # stays f32

    # ---- Token tiling / grid (cdiv: tail block is edge-clipped by Pallas).
    tT = _choose_token_tile(T, B, max_tile)
    grid = (B, pl.cdiv(T, tT))

    out_p = pl.pallas_call(
        _final_layer_kernel,
        out_shape=jax.ShapeDtypeStruct((B, T, O_pad), x.dtype),
        grid_spec=pltpu.PrefetchScalarGridSpec(
            num_scalar_prefetch=0,
            grid=grid,
            in_specs=[
                pl.BlockSpec((1, tT, H), lambda b, t: (b, t, 0)),     # x tile
                pl.BlockSpec((1, H, O_pad), lambda b, t: (b, 0, 0)),  # W_b
                pl.BlockSpec((1, 1, O_pad), lambda b, t: (b, 0, 0)),  # fused bias
            ],
            out_specs=pl.BlockSpec((1, tT, O_pad), lambda b, t: (b, t, 0)),
        ),
        compiler_params=pltpu.CompilerParams(
            dimension_semantics=("parallel", "parallel"),
            vmem_limit_bytes=vmem_limit_bytes,
        ),
    )(x, w_b, bias_b)

    if return_padded or O_pad == O:
        return out_p
    # TODO(synk): fuse this slice into the downstream consumer (unpatchify) to
    # avoid an extra HBM read/write of the padded output.
    return out_p[:, :, :O]


def final_layer_ref(x, c, w_ada, b_ada, w_lin, b_lin):
    """Pure-JAX reference mirroring the PyTorch forward."""
    c_silu = c * jax.nn.sigmoid(c)
    mod = c_silu @ w_ada + b_ada
    H = x.shape[-1]
    shift, scale = mod[:, :H], mod[:, H:]
    mean = jnp.mean(x, axis=-1, keepdims=True)
    var = jnp.mean((x - mean) ** 2, axis=-1, keepdims=True)
    xn = (x - mean) / jnp.sqrt(var + 1e-6)
    xm = xn * (1.0 + scale[:, None, :]) + shift[:, None, :]
    return xm @ w_lin + b_lin


if __name__ == "__main__":
    # Consistent f32 matmul precision for the numerical comparison.
    jax.config.update("jax_default_matmul_precision", "highest")

    # Small, deterministic shapes consistent with FinalLayer(hidden, patch, out_ch)
    B, T = 2, 8
    hidden_size = 32
    patch_size = 2
    out_channels = 4
    O = patch_size * out_channels

    key = jax.random.PRNGKey(0)
    kx, kc, k1, k2, k3, k4 = jax.random.split(key, 6)

    x = jax.random.normal(kx, (B, T, hidden_size), dtype=jnp.float32)
    c = jax.random.normal(kc, (B, hidden_size), dtype=jnp.float32)

    # Deterministic synthetic parameters (shapes match the nn.Linear layers).
    w_ada = 0.02 * jax.random.normal(k1, (hidden_size, 2 * hidden_size), dtype=jnp.float32)
    b_ada = 0.01 * jax.random.normal(k2, (2 * hidden_size,), dtype=jnp.float32)
    w_lin = 0.02 * jax.random.normal(k3, (hidden_size, O), dtype=jnp.float32)
    b_lin = 0.01 * jax.random.normal(k4, (O,), dtype=jnp.float32)

    out = final_layer_pallas(x, c, w_ada, b_ada, w_lin, b_lin)
    out = jax.block_until_ready(out)

    ref = final_layer_ref(x, c, w_ada, b_ada, w_lin, b_lin)
    assert out.shape == (B, T, O), out.shape
    assert jnp.allclose(out, ref, atol=1e-4, rtol=1e-4), \
        float(jnp.max(jnp.abs(out - ref)))

    print("KERNEL_OK")
</pallas_src>

<mosaic_0001>
module attributes {stable_mosaic.version = 11 : i64} {
  func.func @_final_layer_kernel(%arg0: i32, %arg1: i32, %arg2: memref<1x8x32xf32, #tpu.memory_space<vmem>>, %arg3: memref<1x32x128xf32, #tpu.memory_space<vmem>>, %arg4: memref<1x1x128xf32, #tpu.memory_space<vmem>>, %arg5: memref<1x8x128xf32, #tpu.memory_space<vmem>>) attributes {dimension_semantics = [#tpu.dimension_semantics<parallel>, #tpu.dimension_semantics<parallel>], iteration_bounds = array<i64: 2, 1>, scalar_prefetch = 0 : i64, scratch_operands = 0 : i64, tpu.core_type = #tpu.core_type<tc>, window_params = [{transform_indices = @transform_0, window_bounds = array<i64: 1, 8, 32>}, {transform_indices = @transform_1, window_bounds = array<i64: 1, 32, 128>}, {transform_indices = @transform_2, window_bounds = array<i64: 1, 1, 128>}, {transform_indices = @transform_3, window_bounds = array<i64: 1, 8, 128>}]} {
    %c0 = arith.constant 0 : index
    %c0_0 = arith.constant 0 : index
    %c0_1 = arith.constant 0 : index
    %0 = vector.load %arg2[%c0, %c0_0, %c0_1] : memref<1x8x32xf32, #tpu.memory_space<vmem>>, vector<1x8x32xf32>
    %1 = vector.shape_cast %0 : vector<1x8x32xf32> to vector<8x32xf32>
    %cst = arith.constant dense<0.000000e+00> : vector<8xf32>
    %2 = vector.multi_reduction <add>, %1, %cst [1] : vector<8x32xf32> to vector<8xf32>
    %3 = vector.shape_cast %2 : vector<8xf32> to vector<8x1xf32>
    %4 = arith.mulf %1, %1 : vector<8x32xf32>
    %cst_2 = arith.constant dense<0.000000e+00> : vector<8xf32>
    %5 = vector.multi_reduction <add>, %4, %cst_2 [1] : vector<8x32xf32> to vector<8xf32>
    %6 = vector.shape_cast %5 : vector<8xf32> to vector<8x1xf32>
    %cst_3 = arith.constant 3.125000e-02 : f32
    %7 = vector.broadcast %cst_3 : f32 to vector<8x1xf32>
    %8 = arith.mulf %3, %7 : vector<8x1xf32>
    %cst_4 = arith.constant 3.125000e-02 : f32
    %9 = vector.broadcast %cst_4 : f32 to vector<8x1xf32>
    %10 = arith.mulf %6, %9 : vector<8x1xf32>
    %11 = arith.mulf %8, %8 : vector<8x1xf32>
    %12 = arith.subf %10, %11 : vector<8x1xf32>
    %cst_5 = arith.constant 0.000000e+00 : f32
    %13 = vector.broadcast %cst_5 : f32 to vector<8x1xf32>
    %14 = arith.maximumf %12, %13 : vector<8x1xf32>
    %cst_6 = arith.constant 9.99999997E-7 : f32
    %15 = vector.broadcast %cst_6 : f32 to vector<8x1xf32>
    %16 = arith.addf %14, %15 : vector<8x1xf32>
    %17 = math.rsqrt %16 : vector<8x1xf32>
    %18 = vector.broadcast %8 : vector<8x1xf32> to vector<8x32xf32>
    %19 = arith.subf %1, %18 : vector<8x32xf32>
    %c0_7 = arith.constant 0 : index
    %c0_8 = arith.constant 0 : index
    %c0_9 = arith.constant 0 : index
    %20 = vector.load %arg3[%c0_7, %c0_8, %c0_9] : memref<1x32x128xf32, #tpu.memory_space<vmem>>, vector<1x32x128xf32>
    %21 = vector.shape_cast %20 : vector<1x32x128xf32> to vector<32x128xf32>
    %cst_10 = arith.constant dense<0.000000e+00> : vector<8x128xf32>
    %22 = tpu.matmul %19, %21, %cst_10 {dimension_numbers = #tpu.dot_dimension_numbers<[1], [0], [0], [1], [0, 0, 1, 1], [], []>, precision = #tpu.contract_precision<fp32>} : vector<8x32xf32>, vector<32x128xf32>, vector<8x128xf32> -> vector<8x128xf32>
    %23 = vector.broadcast %17 : vector<8x1xf32> to vector<8x128xf32>
    %24 = arith.mulf %22, %23 : vector<8x128xf32>
    %c0_11 = arith.constant 0 : index
    %c0_12 = arith.constant 0 : index
    %c0_13 = arith.constant 0 : index
    %25 = vector.load %arg4[%c0_11, %c0_12, %c0_13] : memref<1x1x128xf32, #tpu.memory_space<vmem>>, vector<1x1x128xf32>
    %26 = vector.shape_cast %25 : vector<1x1x128xf32> to vector<1x128xf32>
    %27 = vector.broadcast %26 : vector<1x128xf32> to vector<8x128xf32>
    %28 = arith.addf %24, %27 : vector<8x128xf32>
    %c0_14 = arith.constant 0 : index
    %c0_15 = arith.constant 0 : index
    %c0_16 = arith.constant 0 : index
    %29 = vector.load %arg5[%c0_14, %c0_15, %c0_16] : memref<1x8x128xf32, #tpu.memory_space<vmem>>, vector<1x8x128xf32>
    %30 = vector.shape_cast %29 : vector<1x8x128xf32> to vector<8x128xf32>
    %31 = vector.shape_cast %28 : vector<8x128xf32> to vector<1x8x128xf32>
    tpu.vector_store %arg5[%c0_14, %c0_15, %c0_16], %31 {strides = array<i32>} : memref<1x8x128xf32, #tpu.memory_space<vmem>>, vector<1x8x128xf32>,
    return
  }
  func.func @transform_0(%arg0: i32, %arg1: i32) -> (i32, i32, i32) {
    %c0_i32 = arith.constant 0 : i32
    %c0_i32_0 = arith.constant 0 : i32
    return %arg0, %arg1, %c0_i32 : i32, i32, i32
  }
  func.func @transform_1(%arg0: i32, %arg1: i32) -> (i32, i32, i32) {
    %c0_i32 = arith.constant 0 : i32
    %c0_i32_0 = arith.constant 0 : i32
    %c0_i32_1 = arith.constant 0 : i32
    return %arg0, %c0_i32, %c0_i32_0 : i32, i32, i32
  }
  func.func @transform_2(%arg0: i32, %arg1: i32) -> (i32, i32, i32) {
    %c0_i32 = arith.constant 0 : i32
    %c0_i32_0 = arith.constant 0 : i32
    %c0_i32_1 = arith.constant 0 : i32
    return %arg0, %c0_i32, %c0_i32_0 : i32, i32, i32
  }
  func.func @transform_3(%arg0: i32, %arg1: i32) -> (i32, i32, i32) {
    %c0_i32 = arith.constant 0 : i32
    %c0_i32_0 = arith.constant 0 : i32
    return %arg0, %arg1, %c0_i32 : i32, i32, i32
  }
}

</mosaic_0001>

<llo_original>
// kernel: tpu_custom_call.1
$region0: #{tpu_custom_call.1}
  #allocation0 [shape = 'u32[]', space=smem, size = 0x4, offset = 0x4, fixed_abs, tag = 'smem constant byte address 0x4 - core index']
  #allocation1 [shape = 'u32[144,128]{1,0:T(1,128)}', space=vmem, size = 0x12000, scoped, tag = 'internal scratch']
  %s0 = inlined_call_operand.hbm [shape: f32[2,8,32], index: 0, kind: input, shape index: {}]
  %s1 = inlined_call_operand.hbm [shape: f32[2,32,128], index: 1, kind: input, shape index: {}]
  %s2 = inlined_call_operand.vmem [shape: f32[2,1,128], index: 2, kind: input, shape index: {}]
  %s3 = inlined_call_operand.hbm [shape: f32[2,8,128], index: 3, kind: output, shape index: {}]
  %s4 = sld [smem:[#allocation0]]
  $region53: #{tpu_custom_call.1} parent=0
    _
  %s6 = ssub.s32 1, %s4
  %s7 = scalar_select 0, %s6, %s4
  $region1: #{tpu_custom_call.1} parent=0
    #allocation2 [shape = 'u8[8192]{0}', space=vmem, size = 0x2000, scoped, tag = 'input window, operand 0']
    #allocation3 [shape = 's32[2]{0}', space=sflag, size = 0x8, scoped, tag = 'scoped memory for tpu_custom_call.1']
    #allocation4 [shape = 's32[2]{0}', space=sflag, size = 0x8, scoped, tag = 'scoped memory for tpu_custom_call.1']
    #allocation5 [shape = 'u8[32768]{0}', space=vmem, size = 0x8000, scoped, tag = 'input window, operand 1']
    #allocation6 [shape = 's32[2]{0}', space=sflag, size = 0x8, scoped, tag = 'scoped memory for tpu_custom_call.1']
    #allocation7 [shape = 'u8[8192]{0}', space=vmem, size = 0x2000, scoped, tag = 'output window, operand 0']
    %8 = vsyncpa [#allocation3], 0
    %s9 = scalar_lea.sflag [#allocation3], 1
    %10 = vsyncpa %s9, 0
    %11 = vsyncpa [#allocation6], 0
    %s12 = scalar_lea.sflag [#allocation6], 1
    %13 = vsyncpa %s12, 0
    %14 = vsyncpa [#allocation4], 0
    %s15 = scalar_lea.sflag [#allocation4], 1
    %16 = vsyncpa %s15, 0
    loop: start=0, step=1, limit=4
    $region2: #{tpu_custom_call.1} parent=1 // loop_pre_header
      _
    $region3: #{tpu_custom_call.1} parent=1 // loop_header
      %s18 = sphi 0, %s22
      %p19 = scmp.ge.s32.totalorder %s18, 4
      %s25 = sphi 0, %s37
      %s26 = sphi 0, %s33
      %s27 = sphi 0, %s25
      %s28 = sphi 0, %s26
      %s29 = sphi 0, %s27
      %s30 = sphi 0, %s28
      %s42 = sphi 0, %s44
      %s45 = sphi 0, %s42
      %s46 = sphi 0, %s45
      %s62 = sphi 0, %s46
      %s68 = sphi 0, %s70
      %s71 = sphi 0, %s68
      %s72 = sphi 0, %s71
      %s88 = sphi 0, %s72
      %s94 = sphi 0, %s96
      %s97 = sphi 0, %s94
      %s98 = sphi 0, %s97
      %s114 = sphi 0, %s98
      %s122 = sphi 0, %s124
      %s125 = sphi 0, %s122
      %s126 = sphi 0, %s125
      %s142 = sphi 0, %s126
    $region4: #{tpu_custom_call.1} parent=1 // loop_header_branch
      %21 = sbr.rel (%p19) target = $region8
    $region5: #{tpu_custom_call.1} parent=1 // loop_body
      %s23 = ssub.s32 %s18, 1
      %s24 = ssub.s32 %s18, 2
      %s31 = sadd.s32 1, %s26
      %p32 = scmp.ge.s32.totalorder %s31, 1
      %s33 = scalar_select %p32, 0, %s31
      %s34 = sadd.s32 1, %s25
      %s35 = scalar_select %p32, %s34, %s25
      %p36 = scmp.ge.s32.totalorder %s35, 2
      %s37 = scalar_select %p36, 0, %s35
      %s38 = ssub.s32 %s25, %s37
      %s39 = ssub.s32 %s26, %s33
      %s40 = sor.u32 %s38, %s39
      %p41 = scmp.eq.s32.totalorder %s40, 0
      %s43 = sadd.s32 %s42, 1
      %s44 = scalar_select %p41, %s42, %s43
      %p47 = pneg %p41
      %p48 = scmp.eq.s32.totalorder %s18, 1
      %p49 = por %p47, %p48
      %p50 = scmp.ne.s32.totalorder %s42, %s45
      %p51 = scmp.eq.s32.totalorder %s18, 0
      %p52 = por %p50, %p51
      %p53 = scmp.ne.s32.totalorder %s42, %s45
      %p54 = scmp.eq.s32.totalorder %s23, 1
      %p55 = por %p53, %p54
      %p56 = scmp.ne.s32.totalorder %s45, %s46
      %p57 = scmp.eq.s32.totalorder %s23, 0
      %p58 = por %p56, %p57
      %p59 = scmp.ne.s32.totalorder %s45, %s46
      %p60 = scmp.eq.s32.totalorder %s24, 1
      %p61 = por %p59, %p60
      %p63 = scmp.ne.s32.totalorder %s46, %s62
      %p64 = scmp.eq.s32.totalorder %s24, 0
      %p65 = por %p63, %p64
      %s66 = ssub.s32 %s25, %s37
      %p67 = scmp.eq.s32.totalorder %s66, 0
      %s69 = sadd.s32 %s68, 1
      %s70 = scalar_select %p67, %s68, %s69
      %p73 = pneg %p67
      %p74 = scmp.eq.s32.totalorder %s18, 1
      %p75 = por %p73, %p74
      %p76 = scmp.ne.s32.totalorder %s68, %s71
      %p77 = scmp.eq.s32.totalorder %s18, 0
      %p78 = por %p76, %p77
      %p79 = scmp.ne.s32.totalorder %s68, %s71
      %p80 = scmp.eq.s32.totalorder %s23, 1
      %p81 = por %p79, %p80
      %p82 = scmp.ne.s32.totalorder %s71, %s72
      %p83 = scmp.eq.s32.totalorder %s23, 0
      %p84 = por %p82, %p83
      %p85 = scmp.ne.s32.totalorder %s71, %s72
      %p86 = scmp.eq.s32.totalorder %s24, 1
      %p87 = por %p85, %p86
      %p89 = scmp.ne.s32.totalorder %s72, %s88
      %p90 = scmp.eq.s32.totalorder %s24, 0
      %p91 = por %p89, %p90
      %s92 = ssub.s32 %s25, %s37
      %p93 = scmp.eq.s32.totalorder %s92, 0
      %s95 = sadd.s32 %s94, 1
      %s96 = scalar_select %p93, %s94, %s95
      %p99 = pneg %p93
      %p100 = scmp.eq.s32.totalorder %s18, 1
      %p101 = por %p99, %p100
      %p102 = scmp.ne.s32.totalorder %s94, %s97
      %p103 = scmp.eq.s32.totalorder %s18, 0
      %p104 = por %p102, %p103
      %p105 = scmp.ne.s32.totalorder %s94, %s97
      %p106 = scmp.eq.s32.totalorder %s23, 1
      %p107 = por %p105, %p106
      %p108 = scmp.ne.s32.totalorder %s97, %s98
      %p109 = scmp.eq.s32.totalorder %s23, 0
      %p110 = por %p108, %p109
      %p111 = scmp.ne.s32.totalorder %s97, %s98
      %p112 = scmp.eq.s32.totalorder %s24, 1
      %p113 = por %p111, %p112
      %p115 = scmp.ne.s32.totalorder %s98, %s114
      %p116 = scmp.eq.s32.totalorder %s24, 0
      %p117 = por %p115, %p116
      %s118 = ssub.s32 %s25, %s37
      %s119 = ssub.s32 %s26, %s33
      %s120 = sor.u32 %s118, %s119
      %p121 = scmp.eq.s32.totalorder %s120, 0
      %s123 = sadd.s32 %s122, 1
      %s124 = scalar_select %p121, %s122, %s123
      %p127 = pneg %p121
      %p128 = scmp.eq.s32.totalorder %s18, 1
      %p129 = por %p127, %p128
      %p130 = scmp.ne.s32.totalorder %s122, %s125
      %p131 = scmp.eq.s32.totalorder %s18, 0
      %p132 = por %p130, %p131
      %p133 = scmp.ne.s32.totalorder %s122, %s125
      %p134 = scmp.eq.s32.totalorder %s23, 1
      %p135 = por %p133, %p134
      %p136 = scmp.ne.s32.totalorder %s125, %s126
      %p137 = scmp.eq.s32.totalorder %s23, 0
      %p138 = por %p136, %p137
      %p139 = scmp.ne.s32.totalorder %s125, %s126
      %p140 = scmp.eq.s32.totalorder %s24, 1
      %p141 = por %p139, %p140
      %p143 = scmp.ne.s32.totalorder %s126, %s142
      %p144 = scmp.eq.s32.totalorder %s24, 0
      %p145 = por %p143, %p144
      %p146 = scmp.le.s32.totalorder 1, %s18
      %p147 = scmp.lt.s32.totalorder %s18, 3
      %p148 = pnand %p146, %p147
      %p149 = pneg %p148
      // Predicated region
      $region9: #{tpu_custom_call.1} parent=5 // pred_check
        _
      $region10: #{tpu_custom_call.1} parent=5 // pred_check_branch
        %151 = sbr.rel (%p148) target = $region12
      $region11: #{tpu_custom_call.1} parent=5 // pred_region
        %s152 = ssub.s32 %s18, 1
      $region12: #{tpu_custom_call.1} parent=5 // pred_fallthru
        _
      %p153 = scmp.lt.s32.totalorder %s18, 2
      // Predicated region
      $region13: #{tpu_custom_call.1} parent=5 // pred_check
        %p154 = pneg %p153
      $region14: #{tpu_custom_call.1} parent=5 // pred_check_branch
        %156 = sbr.rel (%p154) target = $region16
      $region15: #{tpu_custom_call.1} parent=5 // pred_region
        // Predicated region
        $region17: #{tpu_custom_call.1} parent=15 // pred_check
          %p157 = pneg %p52
        $region18: #{tpu_custom_call.1} parent=15 // pred_check_branch
          %159 = sbr.rel (%p157) target = $region20
        $region19: #{tpu_custom_call.1} parent=15 // pred_region
          %s160 = sand.u32 %s42, 1
          %s161 = scalar_lea.sflag [#allocation3], %s160
          %s162 = sand.u32 %s42, 1
          %s163 = smul.addr %s162, 8
          %s164 = scalar_lea.vmem [#allocation2], %s163
          %s166 = ssub.s32 128, 128
          %167 = vsyncadd %s161, %s166
          %s168 = sadd.s32 %s26, %s25
          %s169 = smul.addr %s168, 128
          %s170 = scalar_lea.hbm %s0, %s169
          %s172 = sshll.u32 %s164, 4
          %s173 = int_to_ptr.vmem [resolvable:$true] %s172
          %175 = dma.hbm_to_vmem [thread:$0]  %s170, 128, %s173, %s161
        $region20: #{tpu_custom_call.1} parent=15 // pred_fallthru
          _
        // Predicated region
        $region21: #{tpu_custom_call.1} parent=15 // pred_check
          %p176 = pneg %p78
        $region22: #{tpu_custom_call.1} parent=15 // pred_check_branch
          %178 = sbr.rel (%p176) target = $region24
        $region23: #{tpu_custom_call.1} parent=15 // pred_region
          %s179 = sand.u32 %s68, 1
          %s180 = scalar_lea.sflag [#allocation6], %s179
          %s181 = sand.u32 %s68, 1
          %s182 = smul.addr %s181, 32
          %s183 = scalar_lea.vmem [#allocation5], %s182
          %s185 = ssub.s32 512, 512
          %186 = vsyncadd %s180, %s185
          %s187 = smul.addr %s25, 4
          %s188 = smul.addr %s187, 128
          %s189 = scalar_lea.hbm %s1, %s188
          %s190 = sshll.u32 %s183, 4
          %s191 = int_to_ptr.vmem [resolvable:$true] %s190
          %196 = dma.hbm_to_vmem [thread:$0]  %s189, 512, %s191, %s180, 128, 128, 8
        $region24: #{tpu_custom_call.1} parent=15 // pred_fallthru
          _
        // Predicated region
        $region25: #{tpu_custom_call.1} parent=15 // pred_check
          %p197 = pneg %p104
        $region26: #{tpu_custom_call.1} parent=15 // pred_check_branch
          %199 = sbr.rel (%p197) target = $region28
        $region27: #{tpu_custom_call.1} parent=15 // pred_region
          %p200 = scmp.lt.s32.totalorder %s25, 1
          %s201 = scalar_select %p200, %s25, 1
          %s202 = scalar_lea.vmem %s2, %s201
        $region28: #{tpu_custom_call.1} parent=15 // pred_fallthru
          _
      $region16: #{tpu_custom_call.1} parent=5 // pred_fallthru
        _
      %p203 = scmp.le.s32.totalorder 1, %s18
      %p204 = scmp.lt.s32.totalorder %s18, 3
      %p205 = pnand %p203, %p204
      %p206 = pneg %p205
      // Predicated region
      $region29: #{tpu_custom_call.1} parent=5 // pred_check
        _
      $region30: #{tpu_custom_call.1} parent=5 // pred_check_branch
        %208 = sbr.rel (%p205) target = $region32
      $region31: #{tpu_custom_call.1} parent=5 // pred_region
        %s209 = ssub.s32 %s18, 1
        %s210 = sand.u32 %s45, 1
        %s211 = scalar_lea.sflag [#allocation3], %s210
        %s212 = sand.u32 %s45, 1
        %s213 = smul.addr %s212, 8
        %s214 = scalar_lea.vmem [#allocation2], %s213
        // Predicated region
        $region33: #{tpu_custom_call.1} parent=31 // pred_check
          %p215 = pneg %p58
        $region34: #{tpu_custom_call.1} parent=31 // pred_check_branch
          %217 = sbr.rel (%p215) target = $region36
        $region35: #{tpu_custom_call.1} parent=31 // pred_region
          %218 = dma.done %s211, 128
        $region36: #{tpu_custom_call.1} parent=31 // pred_fallthru
          _
        %s219 = sand.u32 %s71, 1
        %s220 = scalar_lea.sflag [#allocation6], %s219
        %s221 = sand.u32 %s71, 1
        %s222 = smul.addr %s221, 32
        %s223 = scalar_lea.vmem [#allocation5], %s222
        // Predicated region
        $region37: #{tpu_custom_call.1} parent=31 // pred_check
          %p224 = pneg %p84
        $region38: #{tpu_custom_call.1} parent=31 // pred_check_branch
          %226 = sbr.rel (%p224) target = $region40
        $region39: #{tpu_custom_call.1} parent=31 // pred_region
          %227 = dma.done %s220, 512
        $region40: #{tpu_custom_call.1} parent=31 // pred_fallthru
          _
        %s228 = sand.u32 %s45, 1
        %s229 = scalar_lea.sflag [#allocation3], %s228
        %s230 = sand.u32 %s45, 1
        %s231 = smul.addr %s230, 8
        %s232 = scalar_lea.vmem [#allocation2], %s231
        %p233 = pneg %p58
        %p234 = pneg %p55
        %s235 = sand.u32 %s71, 1
        %s236 = scalar_lea.sflag [#allocation6], %s235
        %s237 = sand.u32 %s71, 1
        %s238 = smul.addr %s237, 32
        %s239 = scalar_lea.vmem [#allocation5], %s238
        %p240 = pneg %p84
        %p241 = pneg %p81
        %p242 = scmp.lt.s32.totalorder %s27, 1
        %s243 = scalar_select %p242, %s27, 1
        %s244 = scalar_lea.vmem %s2, %s243
        %p245 = pneg %p110
        %p246 = pneg %p107
        %p247 = pneg %p138
        %p248 = pneg %p135
        %s249 = sand.u32 %s125, 1
        %s250 = scalar_lea.sflag [#allocation4], %s249
        %s251 = sand.u32 %s125, 1
        %s252 = smul.addr %s251, 8
        %s253 = scalar_lea.vmem [#allocation7], %s252
        %p254 = scmp.lt.s32.totalorder %s27, 1
        %s255 = scalar_select %p254, %s27, 1
        %s256 = scalar_lea.vmem %s2, %s255
        %v257 = vld [vmem:[%s214] sm:$0xff]
        %vm258 = vcmask 261120
        %v259 = vsel %vm258, %v257, 0.0
        %260 = vadd.xlane.f32.xlu0 %v259
        %v261 = vpop.xlane.xlu0 %260
        %v262 = vmul.f32 %v257, %v257
        %v263 = vsel %vm258, %v262, 0.0
        %264 = vadd.xlane.f32.xlu0 %v263
        %v265 = vpop.xlane.xlu0 %264
        %v266 = vmul.f32 %v261, 0.03125
        %v267 = vmul.f32 %v265, 0.03125
        %v268 = vmul.f32 %v266, %v266
        %v269 = vsub.f32 %v267, %v268
        %v270 = vmax.f32 %v269, 0.0
        %v271 = vadd.f32 %v270, 1e-06
        %v272 = vrsqrt.pop %v271
        %v273 = vsub.f32 %v257, %v266
        %v274 = vld [vmem:[%s223] sm:$0xff]
        %v275 = vld [vmem:[%s223 + $0x8] sm:$0xff]
        %v276 = vld [vmem:[%s223 + $0x10] sm:$0xff]
        %v277 = vld [vmem:[%s223 + $0x18] sm:$0xff]
        %v279 = vsel %vm258, %v273, 0
        %281 = vmatprep.subr.mxu0 0.0
        %v282 = vand.u32 %v274, 4294901760
        %283 = vmatpush1.msra.mxu0 %v282
        %284 = vmatprep.subr.mxu0 0.0
        %v285 = vand.u32 %v275, 4294901760
        %286 = vmatpush1.msra.mxu0 %v285
        %287 = vmatprep.subr.mxu0 0.0
        %v288 = vand.u32 %v276, 4294901760
        %289 = vmatpush1.msra.mxu0 %v288
        %290 = vmatprep.subr.mxu0 0.0
        %v291 = vand.u32 %v277, 4294901760
        %292 = vmatpush1.msra.mxu0 %v291
        %293 = vmatprep.subr.mxu0 0.0
        %294 = vmatpush1.msra.mxu0 0.0
        %295 = vmatprep.subr.mxu0 0.0
        %296 = vmatpush1.msra.mxu0 0.0
        %297 = vmatprep.subr.mxu0 0.0
        %298 = vmatpush1.msra.mxu0 0.0
        %299 = vmatprep.subr.mxu0 0.0
        %300 = vmatpush1.msra.mxu0 0.0
        %301 = vmatprep.subr.mxu0 0.0
        %302 = vmatpush1.msra.mxu0 0.0
        %303 = vmatprep.subr.mxu0 0.0
        %304 = vmatpush1.msra.mxu0 0.0
        %305 = vmatprep.subr.mxu0 0.0
        %306 = vmatpush1.msra.mxu0 0.0
        %307 = vmatprep.subr.mxu0 0.0
        %308 = vmatpush1.msra.mxu0 0.0
        %309 = vmatprep.subr.mxu0 0.0
        %310 = vmatpush1.msra.mxu0 0.0
        %311 = vmatprep.subr.mxu0 0.0
        %312 = vmatpush1.msra.mxu0 0.0
        %313 = vmatprep.subr.mxu0 0.0
        %314 = vmatpush1.msra.mxu0 0.0
        %315 = vmatprep.subr.mxu0 0.0
        %316 = vmatpush1.msra.mxu0 0.0
        %317 = vmatprep.subr.mxu0 0.0
        %318 = vmatpush1.msra.mxu0 0.0
        %319 = vmatprep.subr.mxu0 0.0
        %320 = vmatpush1.msra.mxu0 0.0
        %321 = vmatprep.subr.mxu0 0.0
        %322 = vmatpush1.msra.mxu0 0.0
        %323 = vmatprep.subr.mxu0 0.0
        %324 = vmatpush1.msra.mxu0 0.0
        %325 = vmatprep.subr.mxu0 0.0
        %326 = vmatpush1.msra.mxu0 0.0
        %327 = vmatprep.subr.mxu0 0.0
        %328 = vmatpush1.msra.mxu0 0.0
        %329 = vmatprep.subr.mxu0 0.0
        %330 = vmatpush1.msra.mxu0 0.0
        %331 = vmatprep.subr.mxu0 0.0
        %332 = vmatpush1.msra.mxu0 0.0
        %333 = vmatprep.subr.mxu0 0.0
        %334 = vmatpush1.msra.mxu0 0.0
        %335 = vmatprep.subr.mxu0 0.0
        %336 = vmatpush1.msra.mxu0 0.0
        %337 = vmatprep.subr.mxu0 0.0
        %338 = vmatpush1.msra.mxu0 0.0
        %339 = vmatprep.subr.mxu0 0.0
        %340 = vmatpush1.msra.mxu0 0.0
        %341 = vmatprep.subr.mxu0 0.0
        %342 = vmatpush1.msra.mxu0 0.0
        %343 = vmatprep.subr.mxu0 0.0
        %344 = vmatpush1.msra.mxu0 0.0
        %345 = vmatprep.subr.mxu0 0.0
        %346 = vmatpush1.msra.mxu0 0.0
        %347 = vmatprep.subr.mxu0 0.0
        %348 = vmatpush1.msra.mxu0 0.0
        %349 = vmatprep.mubr.f32.mxu0 0.0
        %v350 = vand.u32 %v279, 4294901760
        %v351 = vsub.f32 %v279, %v350
        %v352 = vand.u32 %v351, 4294901760
        %v353 = vsub.f32 %v351, %v352
        %v354 = vand.u32 %v353, 4294901760
        %355 = vmatmul.mubr.f32.gmra.mrb[0].mxu0 %v354
        %v356 = vpop.f32.mrb[0].mxu0
        %v357 = vadd.f32 0.0, %v356
        %v358 = vpop.f32.mrb[0].mxu0
        %359 = vdwg.mxu0
        %360 = vmatprep.subr.mxu0 0.0
        %v361 = vand.u32 %v274, 4294901760
        %v362 = vsub.f32 %v274, %v361
        %v363 = vand.u32 %v362, 4294901760
        %v364 = vsub.f32 %v362, %v363
        %v365 = vand.u32 %v364, 4294901760
        %366 = vmatpush1.msra.mxu0 %v365
        %367 = vmatprep.subr.mxu0 0.0
        %v368 = vand.u32 %v275, 4294901760
        %v369 = vsub.f32 %v275, %v368
        %v370 = vand.u32 %v369, 4294901760
        %v371 = vsub.f32 %v369, %v370
        %v372 = vand.u32 %v371, 4294901760
        %373 = vmatpush1.msra.mxu0 %v372
        %374 = vmatprep.subr.mxu0 0.0
        %v375 = vand.u32 %v276, 4294901760
        %v376 = vsub.f32 %v276, %v375
        %v377 = vand.u32 %v376, 4294901760
        %v378 = vsub.f32 %v376, %v377
        %v379 = vand.u32 %v378, 4294901760
        %380 = vmatpush1.msra.mxu0 %v379
        %381 = vmatprep.subr.mxu0 0.0
        %v382 = vand.u32 %v277, 4294901760
        %v383 = vsub.f32 %v277, %v382
        %v384 = vand.u32 %v383, 4294901760
        %v385 = vsub.f32 %v383, %v384
        %v386 = vand.u32 %v385, 4294901760
        %387 = vmatpush1.msra.mxu0 %v386
        %388 = vmatprep.subr.mxu0 0.0
        %389 = vmatpush1.msra.mxu0 0.0
        %390 = vmatprep.subr.mxu0 0.0
        %391 = vmatpush1.msra.mxu0 0.0
        %392 = vmatprep.subr.mxu0 0.0
        %393 = vmatpush1.msra.mxu0 0.0
        %394 = vmatprep.subr.mxu0 0.0
        %395 = vmatpush1.msra.mxu0 0.0
        %396 = vmatprep.subr.mxu0 0.0
        %397 = vmatpush1.msra.mxu0 0.0
        %398 = vmatprep.subr.mxu0 0.0
        %399 = vmatpush1.msra.mxu0 0.0
        %400 = vmatprep.subr.mxu0 0.0
        %401 = vmatpush1.msra.mxu0 0.0
        %402 = vmatprep.subr.mxu0 0.0
        %403 = vmatpush1.msra.mxu0 0.0
        %404 = vmatprep.subr.mxu0 0.0
        %405 = vmatpush1.msra.mxu0 0.0
        %406 = vmatprep.subr.mxu0 0.0
        %407 = vmatpush1.msra.mxu0 0.0
        %408 = vmatprep.subr.mxu0 0.0
        %409 = vmatpush1.msra.mxu0 0.0
        %410 = vmatprep.subr.mxu0 0.0
        %411 = vmatpush1.msra.mxu0 0.0
        %412 = vmatprep.subr.mxu0 0.0
        %413 = vmatpush1.msra.mxu0 0.0
        %414 = vmatprep.subr.mxu0 0.0
        %415 = vmatpush1.msra.mxu0 0.0
        %416 = vmatprep.subr.mxu0 0.0
        %417 = vmatpush1.msra.mxu0 0.0
        %418 = vmatprep.subr.mxu0 0.0
        %419 = vmatpush1.msra.mxu0 0.0
        %420 = vmatprep.subr.mxu0 0.0
        %421 = vmatpush1.msra.mxu0 0.0
        %422 = vmatprep.subr.mxu0 0.0
        %423 = vmatpush1.msra.mxu0 0.0
        %424 = vmatprep.subr.mxu0 0.0
        %425 = vmatpush1.msra.mxu0 0.0
        %426 = vmatprep.subr.mxu0 0.0
        %427 = vmatpush1.msra.mxu0 0.0
        %428 = vmatprep.subr.mxu0 0.0
        %429 = vmatpush1.msra.mxu0 0.0
        %430 = vmatprep.subr.mxu0 0.0
        %431 = vmatpush1.msra.mxu0 0.0
        %432 = vmatprep.subr.mxu0 0.0
        %433 = vmatpush1.msra.mxu0 0.0
        %434 = vmatprep.subr.mxu0 0.0
        %435 = vmatpush1.msra.mxu0 0.0
        %436 = vmatprep.subr.mxu0 0.0
        %437 = vmatpush1.msra.mxu0 0.0
        %438 = vmatprep.subr.mxu0 0.0
        %439 = vmatpush1.msra.mxu0 0.0
        %440 = vmatprep.subr.mxu0 0.0
        %441 = vmatpush1.msra.mxu0 0.0
        %442 = vmatprep.subr.mxu0 0.0
        %443 = vmatpush1.msra.mxu0 0.0
        %444 = vmatprep.mubr.f32.mxu0 0.0
        %v445 = vand.u32 %v279, 4294901760
        %446 = vmatmul.mubr.f32.gmra.mrb[0].mxu0 %v445
        %v447 = vpop.f32.mrb[0].mxu0
        %v448 = vadd.f32 %v357, %v447
        %v449 = vpop.f32.mrb[0].mxu0
        %450 = vdwg.mxu0
        %451 = vmatprep.subr.mxu0 0.0
        %v452 = vand.u32 %v274, 4294901760
        %v453 = vsub.f32 %v274, %v452
        %454 = vmatpush1.msra.mxu0 %v453
        %455 = vmatprep.subr.mxu0 0.0
        %v456 = vand.u32 %v275, 4294901760
        %v457 = vsub.f32 %v275, %v456
        %458 = vmatpush1.msra.mxu0 %v457
        %459 = vmatprep.subr.mxu0 0.0
        %v460 = vand.u32 %v276, 4294901760
        %v461 = vsub.f32 %v276, %v460
        %462 = vmatpush1.msra.mxu0 %v461
        %463 = vmatprep.subr.mxu0 0.0
        %v464 = vand.u32 %v277, 4294901760
        %v465 = vsub.f32 %v277, %v464
        %466 = vmatpush1.msra.mxu0 %v465
        %467 = vmatprep.subr.mxu0 0.0
        %468 = vmatpush1.msra.mxu0 0.0
        %469 = vmatprep.subr.mxu0 0.0
        %470 = vmatpush1.msra.mxu0 0.0
        %471 = vmatprep.subr.mxu0 0.0
        %472 = vmatpush1.msra.mxu0 0.0
        %473 = vmatprep.subr.mxu0 0.0
        %474 = vmatpush1.msra.mxu0 0.0
        %475 = vmatprep.subr.mxu0 0.0
        %476 = vmatpush1.msra.mxu0 0.0
        %477 = vmatprep.subr.mxu0 0.0
        %478 = vmatpush1.msra.mxu0 0.0
        %479 = vmatprep.subr.mxu0 0.0
        %480 = vmatpush1.msra.mxu0 0.0
        %481 = vmatprep.subr.mxu0 0.0
        %482 = vmatpush1.msra.mxu0 0.0
        %483 = vmatprep.subr.mxu0 0.0
        %484 = vmatpush1.msra.mxu0 0.0
        %485 = vmatprep.subr.mxu0 0.0
        %486 = vmatpush1.msra.mxu0 0.0
        %487 = vmatprep.subr.mxu0 0.0
        %488 = vmatpush1.msra.mxu0 0.0
        %489 = vmatprep.subr.mxu0 0.0
        %490 = vmatpush1.msra.mxu0 0.0
        %491 = vmatprep.subr.mxu0 0.0
        %492 = vmatpush1.msra.mxu0 0.0
        %493 = vmatprep.subr.mxu0 0.0
        %494 = vmatpush1.msra.mxu0 0.0
        %495 = vmatprep.subr.mxu0 0.0
        %496 = vmatpush1.msra.mxu0 0.0
        %497 = vmatprep.subr.mxu0 0.0
        %498 = vmatpush1.msra.mxu0 0.0
        %499 = vmatprep.subr.mxu0 0.0
        %500 = vmatpush1.msra.mxu0 0.0
        %501 = vmatprep.subr.mxu0 0.0
        %502 = vmatpush1.msra.mxu0 0.0
        %503 = vmatprep.subr.mxu0 0.0
        %504 = vmatpush1.msra.mxu0 0.0
        %505 = vmatprep.subr.mxu0 0.0
        %506 = vmatpush1.msra.mxu0 0.0
        %507 = vmatprep.subr.mxu0 0.0
        %508 = vmatpush1.msra.mxu0 0.0
        %509 = vmatprep.subr.mxu0 0.0
        %510 = vmatpush1.msra.mxu0 0.0
        %511 = vmatprep.subr.mxu0 0.0
        %512 = vmatpush1.msra.mxu0 0.0
        %513 = vmatprep.subr.mxu0 0.0
        %514 = vmatpush1.msra.mxu0 0.0
        %515 = vmatprep.subr.mxu0 0.0
        %516 = vmatpush1.msra.mxu0 0.0
        %517 = vmatprep.subr.mxu0 0.0
        %518 = vmatpush1.msra.mxu0 0.0
        %519 = vmatprep.subr.mxu0 0.0
        %520 = vmatpush1.msra.mxu0 0.0
        %521 = vmatprep.subr.mxu0 0.0
        %522 = vmatpush1.msra.mxu0 0.0
        %523 = vmatprep.mubr.f32.mxu0 0.0
        %v524 = vand.u32 %v279, 4294901760
        %v525 = vsub.f32 %v279, %v524
        %526 = vmatmul.mubr.f32.gmra.mrb[0].mxu0 %v525
        %v527 = vpop.f32.mrb[0].mxu0
        %v528 = vadd.f32 %v448, %v527
        %v529 = vpop.f32.mrb[0].mxu0
        %530 = vdwg.mxu0
        %531 = vmatprep.subr.mxu0 0.0
        %v532 = vand.u32 %v274, 4294901760
        %533 = vmatpush1.msra.mxu0 %v532
        %534 = vmatprep.subr.mxu0 0.0
        %v535 = vand.u32 %v275, 4294901760
        %536 = vmatpush1.msra.mxu0 %v535
        %537 = vmatprep.subr.mxu0 0.0
        %v538 = vand.u32 %v276, 4294901760
        %539 = vmatpush1.msra.mxu0 %v538
        %540 = vmatprep.subr.mxu0 0.0
        %v541 = vand.u32 %v277, 4294901760
        %542 = vmatpush1.msra.mxu0 %v541
        %543 = vmatprep.subr.mxu0 0.0
        %544 = vmatpush1.msra.mxu0 0.0
        %545 = vmatprep.subr.mxu0 0.0
        %546 = vmatpush1.msra.mxu0 0.0
        %547 = vmatprep.subr.mxu0 0.0
        %548 = vmatpush1.msra.mxu0 0.0
        %549 = vmatprep.subr.mxu0 0.0
        %550 = vmatpush1.msra.mxu0 0.0
        %551 = vmatprep.subr.mxu0 0.0
        %552 = vmatpush1.msra.mxu0 0.0
        %553 = vmatprep.subr.mxu0 0.0
        %554 = vmatpush1.msra.mxu0 0.0
        %555 = vmatprep.subr.mxu0 0.0
        %556 = vmatpush1.msra.mxu0 0.0
        %557 = vmatprep.subr.mxu0 0.0
        %558 = vmatpush1.msra.mxu0 0.0
        %559 = vmatprep.subr.mxu0 0.0
        %560 = vmatpush1.msra.mxu0 0.0
        %561 = vmatprep.subr.mxu0 0.0
        %562 = vmatpush1.msra.mxu0 0.0
        %563 = vmatprep.subr.mxu0 0.0
        %564 = vmatpush1.msra.mxu0 0.0
        %565 = vmatprep.subr.mxu0 0.0
        %566 = vmatpush1.msra.mxu0 0.0
        %567 = vmatprep.subr.mxu0 0.0
        %568 = vmatpush1.msra.mxu0 0.0
        %569 = vmatprep.subr.mxu0 0.0
        %570 = vmatpush1.msra.mxu0 0.0
        %571 = vmatprep.subr.mxu0 0.0
        %572 = vmatpush1.msra.mxu0 0.0
        %573 = vmatprep.subr.mxu0 0.0
        %574 = vmatpush1.msra.mxu0 0.0
        %575 = vmatprep.subr.mxu0 0.0
        %576 = vmatpush1.msra.mxu0 0.0
        %577 = vmatprep.subr.mxu0 0.0
        %578 = vmatpush1.msra.mxu0 0.0
        %579 = vmatprep.subr.mxu0 0.0
        %580 = vmatpush1.msra.mxu0 0.0
        %581 = vmatprep.subr.mxu0 0.0
        %582 = vmatpush1.msra.mxu0 0.0
        %583 = vmatprep.subr.mxu0 0.0
        %584 = vmatpush1.msra.mxu0 0.0
        %585 = vmatprep.subr.mxu0 0.0
        %586 = vmatpush1.msra.mxu0 0.0
        %587 = vmatprep.subr.mxu0 0.0
        %588 = vmatpush1.msra.mxu0 0.0
        %589 = vmatprep.subr.mxu0 0.0
        %590 = vmatpush1.msra.mxu0 0.0
        %591 = vmatprep.subr.mxu0 0.0
        %592 = vmatpush1.msra.mxu0 0.0
        %593 = vmatprep.subr.mxu0 0.0
        %594 = vmatpush1.msra.mxu0 0.0
        %595 = vmatprep.subr.mxu0 0.0
        %596 = vmatpush1.msra.mxu0 0.0
        %597 = vmatprep.subr.mxu0 0.0
        %598 = vmatpush1.msra.mxu0 0.0
        %599 = vmatprep.mubr.f32.mxu0 0.0
        %v600 = vand.u32 %v279, 4294901760
        %v601 = vsub.f32 %v279, %v600
        %v602 = vand.u32 %v601, 4294901760
        %603 = vmatmul.mubr.f32.gmra.mrb[0].mxu0 %v602
        %v604 = vpop.f32.mrb[0].mxu0
        %v605 = vadd.f32 %v528, %v604
        %v606 = vpop.f32.mrb[0].mxu0
        %607 = vdwg.mxu0
        %608 = vmatprep.subr.mxu0 0.0
        %v609 = vand.u32 %v274, 4294901760
        %v610 = vsub.f32 %v274, %v609
        %v611 = vand.u32 %v610, 4294901760
        %612 = vmatpush1.msra.mxu0 %v611
        %613 = vmatprep.subr.mxu0 0.0
        %v614 = vand.u32 %v275, 4294901760
        %v615 = vsub.f32 %v275, %v614
        %v616 = vand.u32 %v615, 4294901760
        %617 = vmatpush1.msra.mxu0 %v616
        %618 = vmatprep.subr.mxu0 0.0
        %v619 = vand.u32 %v276, 4294901760
        %v620 = vsub.f32 %v276, %v619
        %v621 = vand.u32 %v620, 4294901760
        %622 = vmatpush1.msra.mxu0 %v621
        %623 = vmatprep.subr.mxu0 0.0
        %v624 = vand.u32 %v277, 4294901760
        %v625 = vsub.f32 %v277, %v624
        %v626 = vand.u32 %v625, 4294901760
        %627 = vmatpush1.msra.mxu0 %v626
        %628 = vmatprep.subr.mxu0 0.0
        %629 = vmatpush1.msra.mxu0 0.0
        %630 = vmatprep.subr.mxu0 0.0
        %631 = vmatpush1.msra.mxu0 0.0
        %632 = vmatprep.subr.mxu0 0.0
        %633 = vmatpush1.msra.mxu0 0.0
        %634 = vmatprep.subr.mxu0 0.0
        %635 = vmatpush1.msra.mxu0 0.0
        %636 = vmatprep.subr.mxu0 0.0
        %637 = vmatpush1.msra.mxu0 0.0
        %638 = vmatprep.subr.mxu0 0.0
        %639 = vmatpush1.msra.mxu0 0.0
        %640 = vmatprep.subr.mxu0 0.0
        %641 = vmatpush1.msra.mxu0 0.0
        %642 = vmatprep.subr.mxu0 0.0
        %643 = vmatpush1.msra.mxu0 0.0
        %644 = vmatprep.subr.mxu0 0.0
        %645 = vmatpush1.msra.mxu0 0.0
        %646 = vmatprep.subr.mxu0 0.0
        %647 = vmatpush1.msra.mxu0 0.0
        %648 = vmatprep.subr.mxu0 0.0
        %649 = vmatpush1.msra.mxu0 0.0
        %650 = vmatprep.subr.mxu0 0.0
        %651 = vmatpush1.msra.mxu0 0.0
        %652 = vmatprep.subr.mxu0 0.0
        %653 = vmatpush1.msra.mxu0 0.0
        %654 = vmatprep.subr.mxu0 0.0
        %655 = vmatpush1.msra.mxu0 0.0
        %656 = vmatprep.subr.mxu0 0.0
        %657 = vmatpush1.msra.mxu0 0.0
        %658 = vmatprep.subr.mxu0 0.0
        %659 = vmatpush1.msra.mxu0 0.0
        %660 = vmatprep.subr.mxu0 0.0
        %661 = vmatpush1.msra.mxu0 0.0
        %662 = vmatprep.subr.mxu0 0.0
        %663 = vmatpush1.msra.mxu0 0.0
        %664 = vmatprep.subr.mxu0 0.0
        %665 = vmatpush1.msra.mxu0 0.0
        %666 = vmatprep.subr.mxu0 0.0
        %667 = vmatpush1.msra.mxu0 0.0
        %668 = vmatprep.subr.mxu0 0.0
        %669 = vmatpush1.msra.mxu0 0.0
        %670 = vmatprep.subr.mxu0 0.0
        %671 = vmatpush1.msra.mxu0 0.0
        %672 = vmatprep.subr.mxu0 0.0
        %673 = vmatpush1.msra.mxu0 0.0
        %674 = vmatprep.subr.mxu0 0.0
        %675 = vmatpush1.msra.mxu0 0.0
        %676 = vmatprep.subr.mxu0 0.0
        %677 = vmatpush1.msra.mxu0 0.0
        %678 = vmatprep.subr.mxu0 0.0
        %679 = vmatpush1.msra.mxu0 0.0
        %680 = vmatprep.subr.mxu0 0.0
        %681 = vmatpush1.msra.mxu0 0.0
        %682 = vmatprep.subr.mxu0 0.0
        %683 = vmatpush1.msra.mxu0 0.0
        %684 = vmatprep.mubr.f32.mxu0 0.0
        %v685 = vand.u32 %v279, 4294901760
        %686 = vmatmul.mubr.f32.gmra.mrb[0].mxu0 %v685
        %v687 = vpop.f32.mrb[0].mxu0
        %v688 = vadd.f32 %v605, %v687
        %v689 = vpop.f32.mrb[0].mxu0
        %690 = vdwg.mxu0
        %691 = vmatprep.subr.mxu0 0.0
        %v692 = vand.u32 %v274, 4294901760
        %693 = vmatpush1.msra.mxu0 %v692
        %694 = vmatprep.subr.mxu0 0.0
        %v695 = vand.u32 %v275, 4294901760
        %696 = vmatpush1.msra.mxu0 %v695
        %697 = vmatprep.subr.mxu0 0.0
        %v698 = vand.u32 %v276, 4294901760
        %699 = vmatpush1.msra.mxu0 %v698
        %700 = vmatprep.subr.mxu0 0.0
        %v701 = vand.u32 %v277, 4294901760
        %702 = vmatpush1.msra.mxu0 %v701
        %703 = vmatprep.subr.mxu0 0.0
        %704 = vmatpush1.msra.mxu0 0.0
        %705 = vmatprep.subr.mxu0 0.0
        %706 = vmatpush1.msra.mxu0 0.0
        %707 = vmatprep.subr.mxu0 0.0
        %708 = vmatpush1.msra.mxu0 0.0
        %709 = vmatprep.subr.mxu0 0.0
        %710 = vmatpush1.msra.mxu0 0.0
        %711 = vmatprep.subr.mxu0 0.0
        %712 = vmatpush1.msra.mxu0 0.0
        %713 = vmatprep.subr.mxu0 0.0
        %714 = vmatpush1.msra.mxu0 0.0
        %715 = vmatprep.subr.mxu0 0.0
        %716 = vmatpush1.msra.mxu0 0.0
        %717 = vmatprep.subr.mxu0 0.0
        %718 = vmatpush1.msra.mxu0 0.0
        %719 = vmatprep.subr.mxu0 0.0
        %720 = vmatpush1.msra.mxu0 0.0
        %721 = vmatprep.subr.mxu0 0.0
        %722 = vmatpush1.msra.mxu0 0.0
        %723 = vmatprep.subr.mxu0 0.0
        %724 = vmatpush1.msra.mxu0 0.0
        %725 = vmatprep.subr.mxu0 0.0
        %726 = vmatpush1.msra.mxu0 0.0
        %727 = vmatprep.subr.mxu0 0.0
        %728 = vmatpush1.msra.mxu0 0.0
        %729 = vmatprep.subr.mxu0 0.0
        %730 = vmatpush1.msra.mxu0 0.0
        %731 = vmatprep.subr.mxu0 0.0
        %732 = vmatpush1.msra.mxu0 0.0
        %733 = vmatprep.subr.mxu0 0.0
        %734 = vmatpush1.msra.mxu0 0.0
        %735 = vmatprep.subr.mxu0 0.0
        %736 = vmatpush1.msra.mxu0 0.0
        %737 = vmatprep.subr.mxu0 0.0
        %738 = vmatpush1.msra.mxu0 0.0
        %739 = vmatprep.subr.mxu0 0.0
        %740 = vmatpush1.msra.mxu0 0.0
        %741 = vmatprep.subr.mxu0 0.0
        %742 = vmatpush1.msra.mxu0 0.0
        %743 = vmatprep.subr.mxu0 0.0
        %744 = vmatpush1.msra.mxu0 0.0
        %745 = vmatprep.subr.mxu0 0.0
        %746 = vmatpush1.msra.mxu0 0.0
        %747 = vmatprep.subr.mxu0 0.0
        %748 = vmatpush1.msra.mxu0 0.0
        %749 = vmatprep.subr.mxu0 0.0
        %750 = vmatpush1.msra.mxu0 0.0
        %751 = vmatprep.subr.mxu0 0.0
        %752 = vmatpush1.msra.mxu0 0.0
        %753 = vmatprep.subr.mxu0 0.0
        %754 = vmatpush1.msra.mxu0 0.0
        %755 = vmatprep.subr.mxu0 0.0
        %756 = vmatpush1.msra.mxu0 0.0
        %757 = vmatprep.subr.mxu0 0.0
        %758 = vmatpush1.msra.mxu0 0.0
        %759 = vmatprep.mubr.f32.mxu0 0.0
        %v760 = vand.u32 %v279, 4294901760
        %761 = vmatmul.mubr.f32.gmra.mrb[0].mxu0 %v760
        %v762 = vpop.f32.mrb[0].mxu0
        %v763 = vadd.f32 %v688, %v762
        %v764 = vpop.f32.mrb[0].mxu0
        %765 = vdwg.mxu0
        %v766 = vmul.f32 %v763, %v272
        %v767 = vld [vmem:[%s256] sm:$0x1]
        %v769 = vlaneseq
        %v770 = vshrl.u32 %v769, 7
        %v771 = vsub.s32 0, %v770
        %v772 = vrot.slane %v767, %v771
        %v774 = vadd.f32 %v766, %v772
        %775 = vst [vmem:[%s253] sm:$0xff] %v774
        %s776 = sand.u32 %s125, 1
        %s777 = scalar_lea.sflag [#allocation4], %s776
        %s778 = sand.u32 %s125, 1
        %s779 = smul.addr %s778, 8
        %s780 = scalar_lea.vmem [#allocation7], %s779
        // Predicated region
        $region41: #{tpu_custom_call.1} parent=31 // pred_check
          %p781 = pneg %p135
        $region42: #{tpu_custom_call.1} parent=31 // pred_check_branch
          %783 = sbr.rel (%p781) target = $region44
        $region43: #{tpu_custom_call.1} parent=31 // pred_region
          %s785 = ssub.s32 128, 128
          %786 = vsyncadd %s777, %s785
          %s787 = sadd.s32 %s28, %s27
          %s788 = smul.addr %s787, 128
          %s789 = scalar_lea.hbm %s3, %s788
          %s791 = sshll.u32 %s780, 4
          %s792 = int_to_ptr.vmem [resolvable:$true] %s791
          %794 = dma.vmem_to_hbm [thread:$0]  %s792, 128, %s789, %s777
        $region44: #{tpu_custom_call.1} parent=31 // pred_fallthru
          _
      $region32: #{tpu_custom_call.1} parent=5 // pred_fallthru
        _
      %p795 = scmp.le.s32.totalorder 2, %s18
      // Predicated region
      $region45: #{tpu_custom_call.1} parent=5 // pred_check
        %p796 = pneg %p795
      $region46: #{tpu_custom_call.1} parent=5 // pred_check_branch
        %798 = sbr.rel (%p796) target = $region48
      $region47: #{tpu_custom_call.1} parent=5 // pred_region
        %s799 = ssub.s32 %s18, 2
        // Predicated region
        $region49: #{tpu_custom_call.1} parent=47 // pred_check
          %p800 = pneg %p141
        $region50: #{tpu_custom_call.1} parent=47 // pred_check_branch
          %802 = sbr.rel (%p800) target = $region52
        $region51: #{tpu_custom_call.1} parent=47 // pred_region
          %s803 = sand.u32 %s126, 1
          %s804 = scalar_lea.sflag [#allocation4], %s803
          %s805 = sand.u32 %s126, 1
          %s806 = smul.addr %s805, 8
          %s807 = scalar_lea.vmem [#allocation7], %s806
          %808 = dma.done %s804, 128
        $region52: #{tpu_custom_call.1} parent=47 // pred_fallthru
          _
      $region48: #{tpu_custom_call.1} parent=5 // pred_fallthru
        _
    $region6: #{tpu_custom_call.1} parent=1 // loop_footer
      %s22 = sadd.s32 1, %s18
    $region7: #{tpu_custom_call.1} parent=1 // loop_footer_branch
      %17 = sbr.rel target = $region3
    $region8: #{tpu_custom_call.1} parent=1 // loop_exit
      _
    %809 = vsyncpa [#allocation3], 1
    %s810 = scalar_lea.sflag [#allocation3], 1
    %811 = vsyncpa %s810, 1
    %812 = vsyncpa [#allocation6], 1
    %s813 = scalar_lea.sflag [#allocation6], 1
    %814 = vsyncpa %s813, 1
    %815 = vsyncpa [#allocation4], 1
    %s816 = scalar_lea.sflag [#allocation4], 1
    %817 = vsyncpa %s816, 1

</llo_original>
